<compile_context>
chip_gen: v7x
topology: tpu7x:2x2x1
jax: 0.10.0
libtpu: 0.0.40
codegen_flags: <defaults>
</compile_context>

<pallas_src>
import functools

import jax
import jax.numpy as jnp
from jax.experimental import pallas as pl
from jax.experimental.pallas import tpu as pltpu


# ----------------------------------------------------------------------------- helpers


def _round_up(n, m):
    return ((n + m - 1) // m) * m


def _pad_to(a, shape):
    pads = [(0, t - s) for s, t in zip(a.shape, shape)]
    return jnp.pad(a, pads)


def _choose_grid(B, *, max_block=1024, split_threshold=512):
    """Pick (block_b, steps, padded_B).

    - B < split_threshold: one grid step over the whole batch (per-step
      overhead ~0.35us dwarfs the compute; weights are resident so extra
      steps buy nothing on a single TensorCore).
    - B >= split_threshold: at least 2 steps so dimension_semantics=("parallel",)
      has something to shard across v7x's two TensorCores, with <= max_block
      rows per step (per-step working set stays far below the 32 MiB scoped
      VMEM default on every generation).
    - Batch is zero-padded to steps*block_b so any B works.
    """
    if B < split_threshold:
        return B, 1, B
    steps = max(2, pl.cdiv(B, max_block))
    block_b = _round_up(pl.cdiv(B, steps), 8)
    return block_b, steps, steps * block_b


# ----------------------------------------------------------------------------- kernels


def _gru_estimator_kernel(hp, hdim,
                          x_ref, hin_ref,
                          w1_ref, b1_ref,
                          wih_ref, bih_ref,
                          whh_ref, bhh_ref,
                          w2_ref, b2_ref,
                          est_ref, h_ref):
    """fc1 -> ReLU -> GRUCell -> fc2, fused.

    x_ref/hin_ref are unpadded f32; weights are compute-dtype with per-gate
    lane padding to hp=round_up(H,128); all elementwise math is f32."""
    f32 = jnp.float32
    cd = w1_ref.dtype

    # fc1 + ReLU (cast to compute dtype for the MXU, f32 accumulate/elementwise)
    x = jnp.dot(x_ref[...].astype(cd), w1_ref[...], preferred_element_type=f32)
    x = jnp.maximum(x + b1_ref[...], 0.0)                       # (bb, Hp) f32

    h_prev = hin_ref[...]                                       # (bb, H) f32 carry

    # GRUCell (PyTorch gate order r, z, n); gate blocks are 128-lane aligned.
    gi = jnp.dot(x.astype(cd), wih_ref[...],
                 preferred_element_type=f32) + bih_ref[...]      # (bb, 3Hp)
    gh = jnp.dot(h_prev.astype(cd), whh_ref[...],
                 preferred_element_type=f32) + bhh_ref[...]      # (bb, 3Hp)

    r = jax.nn.sigmoid(gi[:, 0:hp] + gh[:, 0:hp])
    z = jax.nn.sigmoid(gi[:, hp:2 * hp] + gh[:, hp:2 * hp])
    n = jnp.tanh(gi[:, 2 * hp:3 * hp] + r * gh[:, 2 * hp:3 * hp])

    z_h = z[:, :hdim]
    h = (1.0 - z_h) * n[:, :hdim] + z_h * h_prev                # (bb, H) f32

    # fc2 (K = H unpadded)
    est = jnp.dot(h.astype(cd), w2_ref[...],
                  preferred_element_type=f32) + b2_ref[...]      # (bb, S) f32

    est_ref[...] = est.astype(est_ref.dtype)
    h_ref[...] = h.astype(h_ref.dtype)


def _linear_estimator_kernel(hdim,
                             x_ref,
                             w1_ref, b1_ref,
                             wr_ref, br_ref,
                             w2_ref, b2_ref,
                             est_ref, h_ref):
    """fc1 -> ReLU -> Linear -> ReLU -> fc2, fused.  hidden_state is not an
    operand on this branch (unused in the PyTorch module too)."""
    f32 = jnp.float32
    cd = w1_ref.dtype

    x = jnp.dot(x_ref[...].astype(cd), w1_ref[...], preferred_element_type=f32)
    x = jnp.maximum(x + b1_ref[...], 0.0)                        # (bb, Hp)

    h = jnp.dot(x.astype(cd), wr_ref[...], preferred_element_type=f32)
    h = jnp.maximum(h + br_ref[...], 0.0)                        # (bb, Hp)

    est = jnp.dot(h.astype(cd), w2_ref[...],
                  preferred_element_type=f32) + b2_ref[...]      # (bb, S)

    est_ref[...] = est.astype(est_ref.dtype)
    h_ref[...] = h[:, :hdim].astype(h_ref.dtype)


# ----------------------------------------------------------------------------- param preparation


def prepare_params(torch_params, input_shape, hidden_dim, state_repre_dim,
                   est_use_rnn, compute_dtype=jnp.bfloat16):
    """Convert PyTorch-layout f32 params into transposed, MXU-ready arrays.

    Weights: [in, out] in compute_dtype.  Output (N) dims that feed further
    matmuls/gates are lane-padded to 128 (GRU gates padded per-gate so slices
    are vreg-aligned); K dims that consume unpadded activations stay unpadded.
    Biases: [1, out] in f32.  Done once, outside the kernel."""
    F, H, S = input_shape, hidden_dim, state_repre_dim
    Hp = _round_up(H, 128)
    f32 = jnp.float32

    def wmat(a, rows, cols):
        return _pad_to(jnp.asarray(a, f32).T, (rows, cols)).astype(compute_dtype)

    def bvec(a, cols):
        return _pad_to(jnp.asarray(a, f32).reshape(1, -1), (1, cols))

    p = {
        "w1": wmat(torch_params["fc1.weight"], F, Hp),   # (F, Hp)
        "b1": bvec(torch_params["fc1.bias"], Hp),        # (1, Hp)
    }

    if est_use_rnn:
        def gate_w(a, k_rows):  # torch [3H, H] -> [k_rows, 3*Hp], per-gate lane pad (r|z|n)
            wt = jnp.asarray(a, f32).T  # [H, 3H]
            gates = [_pad_to(wt[:, g * H:(g + 1) * H], (k_rows, Hp)) for g in range(3)]
            return jnp.concatenate(gates, axis=1).astype(compute_dtype)

        def gate_b(a):  # torch [3H] -> [1, 3*Hp]
            bb = jnp.asarray(a, f32)
            gates = [_pad_to(bb[g * H:(g + 1) * H].reshape(1, -1), (1, Hp))
                     for g in range(3)]
            return jnp.concatenate(gates, axis=1)

        p["w_ih"] = gate_w(torch_params["rnn.weight_ih"], Hp)   # (Hp, 3Hp)
        p["b_ih"] = gate_b(torch_params["rnn.bias_ih"])         # (1, 3Hp)
        p["w_hh"] = gate_w(torch_params["rnn.weight_hh"], H)    # (H, 3Hp)
        p["b_hh"] = gate_b(torch_params["rnn.bias_hh"])         # (1, 3Hp)
        p["w2"] = wmat(torch_params["fc2.weight"], H, S)        # (H, S) unpadded
        p["b2"] = bvec(torch_params["fc2.bias"], S)             # (1, S)
    else:
        p["w_r"] = wmat(torch_params["rnn.weight"], Hp, Hp)     # (Hp, Hp)
        p["b_r"] = bvec(torch_params["rnn.bias"], Hp)           # (1, Hp)
        p["w2"] = wmat(torch_params["fc2.weight"], Hp, S)       # (Hp, S)
        p["b2"] = bvec(torch_params["fc2.bias"], S)             # (1, S)

    p["dims"] = (F, H, S, Hp)
    p["est_use_rnn"] = est_use_rnn
    return p


# ----------------------------------------------------------------------------- wrapper


def mlp_estimator_forward(inputs, hidden_state, prepared, *, block_b=None):
    """Pallas implementation of MLPEstimator.forward.

    inputs:       [B, input_shape] float32
    hidden_state: [..., hidden_dim] (reshaped to [B, H]; ignored on non-RNN branch)
    returns (estimated_repre [B, state_repre_dim] f32, h [B, hidden_dim] f32)
    """
    F, H, S, Hp = prepared["dims"]
    est_use_rnn = prepared["est_use_rnn"]

    B = inputs.shape[0]
    assert inputs.shape[1] == F

    if block_b is None:
        block_b, steps, B_pad = _choose_grid(B)
    else:
        steps = pl.cdiv(B, block_b)
        B_pad = steps * block_b
        assert block_b % 8 == 0 or (steps == 1 and block_b == B), \
            "block_b must be a multiple of 8 (sublane) or cover the whole batch"
    grid = (steps,)

    x = jnp.asarray(inputs, jnp.float32)
    if B_pad != B:
        x = jnp.pad(x, ((0, B_pad - B), (0, 0)))

    def row_spec(cols):           # batch-tiled activations / outputs (f32, unpadded)
        return pl.BlockSpec((block_b, cols), lambda i: (i, 0))

    def full_spec(arr):           # weights/biases: resident across grid steps
        return pl.BlockSpec(arr.shape, lambda i: (0, 0))

    if est_use_rnn:
        h_in = jnp.asarray(hidden_state, jnp.float32).reshape(-1, H)
        assert h_in.shape[0] == B, "hidden_state must flatten to [B, hidden_dim]"
        if B_pad != B:
            h_in = jnp.pad(h_in, ((0, B_pad - B), (0, 0)))

        weights = (prepared["w1"], prepared["b1"],
                   prepared["w_ih"], prepared["b_ih"],
                   prepared["w_hh"], prepared["b_hh"],
                   prepared["w2"], prepared["b2"])
        kernel = functools.partial(_gru_estimator_kernel, Hp, H)
        operands = (x, h_in) + weights
        in_specs = [row_spec(F), row_spec(H)] + [full_spec(w) for w in weights]
        flops = 2 * B_pad * (F * Hp + Hp * 3 * Hp + H * 3 * Hp + H * S)
        transcendentals = 3 * B_pad * Hp      # 2 sigmoids + 1 tanh per hidden lane
    else:
        weights = (prepared["w1"], prepared["b1"],
                   prepared["w_r"], prepared["b_r"],
                   prepared["w2"], prepared["b2"])
        kernel = functools.partial(_linear_estimator_kernel, H)
        operands = (x,) + weights
        in_specs = [row_spec(F)] + [full_spec(w) for w in weights]
        flops = 2 * B_pad * (F * Hp + Hp * Hp + Hp * S)
        transcendentals = 0

    bytes_accessed = (sum(int(a.size) * a.dtype.itemsize for a in operands)
                      + B_pad * (S + H) * 4)

    est_p, h_p = pl.pallas_call(
        kernel,
        grid=grid,
        in_specs=in_specs,
        out_specs=(row_spec(S), row_spec(H)),
        out_shape=(jax.ShapeDtypeStruct((B_pad, S), jnp.float32),
                   jax.ShapeDtypeStruct((B_pad, H), jnp.float32)),
        compiler_params=pltpu.CompilerParams(dimension_semantics=("parallel",)),
        cost_estimate=pl.CostEstimate(flops=int(flops),
                                      transcendentals=int(transcendentals),
                                      bytes_accessed=int(bytes_accessed)),
    )(*operands)

    if B_pad != B:                # only for awkward batch sizes
        est_p, h_p = est_p[:B], h_p[:B]
    return est_p, h_p


# ----------------------------------------------------------------------------- reference (plain JAX, f32, PyTorch layout)


def _reference_forward(inputs, hidden_state, torch_params, *, est_use_rnn, hidden_dim):
    H = hidden_dim
    f32 = jnp.float32
    hi = jax.lax.Precision.HIGHEST

    def lin(a, w, b):
        return jnp.dot(a, jnp.asarray(w, f32).T, precision=hi) + jnp.asarray(b, f32)

    x = jnp.maximum(lin(inputs, torch_params["fc1.weight"], torch_params["fc1.bias"]), 0.0)
    h_in = hidden_state.reshape(-1, H)
    if est_use_rnn:
        gi = lin(x, torch_params["rnn.weight_ih"], torch_params["rnn.bias_ih"])
        gh = lin(h_in, torch_params["rnn.weight_hh"], torch_params["rnn.bias_hh"])
        i_r, i_z, i_n = gi[:, :H], gi[:, H:2 * H], gi[:, 2 * H:]
        h_r, h_z, h_n = gh[:, :H], gh[:, H:2 * H], gh[:, 2 * H:]
        r = jax.nn.sigmoid(i_r + h_r)
        z = jax.nn.sigmoid(i_z + h_z)
        n = jnp.tanh(i_n + r * h_n)
        h = (1.0 - z) * n + z * h_in
    else:
        h = jnp.maximum(lin(x, torch_params["rnn.weight"], torch_params["rnn.bias"]), 0.0)
    est = lin(h, torch_params["fc2.weight"], torch_params["fc2.bias"])
    return est, h


# ----------------------------------------------------------------------------- synthetic params (PyTorch layout)


def _make_torch_params(key, input_shape, hidden_dim, state_repre_dim):
    ks = jax.random.split(key, 10)

    def unif(k, shape, fan_in):
        bound = 1.0 / jnp.sqrt(fan_in)
        return jax.random.uniform(k, shape, jnp.float32, -bound, bound)

    F, H, S = input_shape, hidden_dim, state_repre_dim
    return {
        "fc1.weight": unif(ks[0], (H, F), F), "fc1.bias": unif(ks[1], (H,), F),
        "rnn.weight_ih": unif(ks[2], (3 * H, H), H), "rnn.bias_ih": unif(ks[3], (3 * H,), H),
        "rnn.weight_hh": unif(ks[4], (3 * H, H), H), "rnn.bias_hh": unif(ks[5], (3 * H,), H),
        "rnn.weight": unif(ks[6], (H, H), H), "rnn.bias": unif(ks[7], (H,), H),
        "fc2.weight": unif(ks[8], (S, H), H), "fc2.bias": unif(ks[9], (S,), H),
    }


# ----------------------------------------------------------------------------- main


if __name__ == "__main__":
    key = jax.random.PRNGKey(0)
    k_in, k_h, k_p = jax.random.split(key, 3)

    B, F, H, S = 8, 32, 32, 16
    inputs = jax.random.normal(k_in, (B, F), jnp.float32)
    hidden_state = jax.random.normal(k_h, (B, H), jnp.float32)
    torch_params = _make_torch_params(k_p, F, H, S)

    ok = True

    # Both module branches; f32 compute (tight check) and bf16 MXU path (loose check).
    for est_use_rnn in (True, False):
        est_ref, h_ref = _reference_forward(inputs, hidden_state, torch_params,
                                            est_use_rnn=est_use_rnn, hidden_dim=H)
        for cd, tol in ((jnp.float32, 1e-4), (jnp.bfloat16, 5e-2)):
            prepared = prepare_params(torch_params, F, H, S, est_use_rnn, compute_dtype=cd)
            est, h = mlp_estimator_forward(inputs, hidden_state, prepared)
            est = jax.block_until_ready(est)
            h = jax.block_until_ready(h)
            ok &= bool(jnp.allclose(est, est_ref, atol=tol, rtol=tol))
            ok &= bool(jnp.allclose(h, h_ref, atol=tol, rtol=tol))

    # Awkward large batch: default grid chooser -> 2 steps (dual-TC split path)
    # with batch padding (600 -> 2 x 304).
    B2 = 600
    inputs2 = jax.random.normal(k_in, (B2, F), jnp.float32)
    hidden2 = jax.random.normal(k_h, (B2, H), jnp.float32)
    prepared2 = prepare_params(torch_params, F, H, S, True, compute_dtype=jnp.bfloat16)
    est2, h2 = mlp_estimator_forward(inputs2, hidden2, prepared2)
    est2 = jax.block_until_ready(est2)
    h2 = jax.block_until_ready(h2)
    est2_ref, h2_ref = _reference_forward(inputs2, hidden2, torch_params,
                                          est_use_rnn=True, hidden_dim=H)
    ok &= est2.shape == (B2, S) and h2.shape == (B2, H)
    ok &= bool(jnp.allclose(est2, est2_ref, atol=5e-2, rtol=5e-2))
    ok &= bool(jnp.allclose(h2, h2_ref, atol=5e-2, rtol=5e-2))

    # Explicit multi-step tiling without padding.
    B3 = 256
    inputs3 = jax.random.normal(k_in, (B3, F), jnp.float32)
    hidden3 = jax.random.normal(k_h, (B3, H), jnp.float32)
    est3, h3 = mlp_estimator_forward(inputs3, hidden3, prepared2, block_b=64)
    est3 = jax.block_until_ready(est3)
    h3 = jax.block_until_ready(h3)
    est3_ref, h3_ref = _reference_forward(inputs3, hidden3, torch_params,
                                          est_use_rnn=True, hidden_dim=H)
    ok &= bool(jnp.allclose(est3, est3_ref, atol=5e-2, rtol=5e-2))
    ok &= bool(jnp.allclose(h3, h3_ref, atol=5e-2, rtol=5e-2))

    if ok:
        print("KERNEL_OK")
</pallas_src>

<mosaic_0001>
module attributes {stable_mosaic.version = 11 : i64} {
  func.func @_gru_estimator_kernel(%arg0: i32, %arg1: memref<8x32xf32, #tpu.memory_space<vmem>>, %arg2: memref<8x32xf32, #tpu.memory_space<vmem>>, %arg3: memref<32x128xf32, #tpu.memory_space<vmem>>, %arg4: memref<1x128xf32, #tpu.memory_space<vmem>>, %arg5: memref<128x384xf32, #tpu.memory_space<vmem>>, %arg6: memref<1x384xf32, #tpu.memory_space<vmem>>, %arg7: memref<32x384xf32, #tpu.memory_space<vmem>>, %arg8: memref<1x384xf32, #tpu.memory_space<vmem>>, %arg9: memref<32x16xf32, #tpu.memory_space<vmem>>, %arg10: memref<1x16xf32, #tpu.memory_space<vmem>>, %arg11: memref<8x16xf32, #tpu.memory_space<vmem>>, %arg12: memref<8x32xf32, #tpu.memory_space<vmem>>) attributes {dimension_semantics = [#tpu.dimension_semantics<parallel>], iteration_bounds = array<i64: 1>, scalar_prefetch = 0 : i64, scratch_operands = 0 : i64, tpu.core_type = #tpu.core_type<tc>, window_params = [{transform_indices = @transform_0, window_bounds = array<i64: 8, 32>}, {transform_indices = @transform_1, window_bounds = array<i64: 8, 32>}, {pipeline_mode = #tpu.pipeline_mode<synchronous>, transform_indices = @transform_2, window_bounds = array<i64: 32, 128>}, {pipeline_mode = #tpu.pipeline_mode<synchronous>, transform_indices = @transform_3, window_bounds = array<i64: 1, 128>}, {pipeline_mode = #tpu.pipeline_mode<synchronous>, transform_indices = @transform_4, window_bounds = array<i64: 128, 384>}, {pipeline_mode = #tpu.pipeline_mode<synchronous>, transform_indices = @transform_5, window_bounds = array<i64: 1, 384>}, {pipeline_mode = #tpu.pipeline_mode<synchronous>, transform_indices = @transform_6, window_bounds = array<i64: 32, 384>}, {pipeline_mode = #tpu.pipeline_mode<synchronous>, transform_indices = @transform_7, window_bounds = array<i64: 1, 384>}, {pipeline_mode = #tpu.pipeline_mode<synchronous>, transform_indices = @transform_8, window_bounds = array<i64: 32, 16>}, {pipeline_mode = #tpu.pipeline_mode<synchronous>, transform_indices = @transform_9, window_bounds = array<i64: 1, 16>}, {transform_indices = @transform_10, window_bounds = array<i64: 8, 16>}, {transform_indices = @transform_11, window_bounds = array<i64: 8, 32>}]} {
    %c0 = arith.constant 0 : index
    %c0_0 = arith.constant 0 : index
    %0 = vector.load %arg1[%c0, %c0_0] : memref<8x32xf32, #tpu.memory_space<vmem>>, vector<8x32xf32>
    %c0_1 = arith.constant 0 : index
    %c0_2 = arith.constant 0 : index
    %1 = vector.load %arg3[%c0_1, %c0_2] : memref<32x128xf32, #tpu.memory_space<vmem>>, vector<32x128xf32>
    %cst = arith.constant dense<0.000000e+00> : vector<8x128xf32>
    %2 = tpu.matmul %0, %1, %cst {dimension_numbers = #tpu.dot_dimension_numbers<[1], [0], [0], [1], [0, 0, 1, 1], [], []>} : vector<8x32xf32>, vector<32x128xf32>, vector<8x128xf32> -> vector<8x128xf32>
    %c0_3 = arith.constant 0 : index
    %c0_4 = arith.constant 0 : index
    %3 = vector.load %arg4[%c0_3, %c0_4] : memref<1x128xf32, #tpu.memory_space<vmem>>, vector<1x128xf32>
    %4 = vector.broadcast %3 : vector<1x128xf32> to vector<8x128xf32>
    %5 = arith.addf %2, %4 : vector<8x128xf32>
    %cst_5 = arith.constant 0.000000e+00 : f32
    %6 = vector.broadcast %cst_5 : f32 to vector<8x128xf32>
    %7 = arith.maximumf %5, %6 : vector<8x128xf32>
    %c0_6 = arith.constant 0 : index
    %c0_7 = arith.constant 0 : index
    %8 = vector.load %arg2[%c0_6, %c0_7] : memref<8x32xf32, #tpu.memory_space<vmem>>, vector<8x32xf32>
    %c0_8 = arith.constant 0 : index
    %c0_9 = arith.constant 0 : index
    %9 = vector.load %arg5[%c0_8, %c0_9] : memref<128x384xf32, #tpu.memory_space<vmem>>, vector<128x384xf32>
    %cst_10 = arith.constant dense<0.000000e+00> : vector<8x384xf32>
    %10 = tpu.matmul %7, %9, %cst_10 {dimension_numbers = #tpu.dot_dimension_numbers<[1], [0], [0], [1], [0, 0, 1, 1], [], []>} : vector<8x128xf32>, vector<128x384xf32>, vector<8x384xf32> -> vector<8x384xf32>
    %c0_11 = arith.constant 0 : index
    %c0_12 = arith.constant 0 : index
    %11 = vector.load %arg6[%c0_11, %c0_12] : memref<1x384xf32, #tpu.memory_space<vmem>>, vector<1x384xf32>
    %12 = vector.broadcast %11 : vector<1x384xf32> to vector<8x384xf32>
    %13 = arith.addf %10, %12 : vector<8x384xf32>
    %c0_13 = arith.constant 0 : index
    %c0_14 = arith.constant 0 : index
    %14 = vector.load %arg7[%c0_13, %c0_14] : memref<32x384xf32, #tpu.memory_space<vmem>>, vector<32x384xf32>
    %cst_15 = arith.constant dense<0.000000e+00> : vector<8x384xf32>
    %15 = tpu.matmul %8, %14, %cst_15 {dimension_numbers = #tpu.dot_dimension_numbers<[1], [0], [0], [1], [0, 0, 1, 1], [], []>} : vector<8x32xf32>, vector<32x384xf32>, vector<8x384xf32> -> vector<8x384xf32>
    %c0_16 = arith.constant 0 : index
    %c0_17 = arith.constant 0 : index
    %16 = vector.load %arg8[%c0_16, %c0_17] : memref<1x384xf32, #tpu.memory_space<vmem>>, vector<1x384xf32>
    %17 = vector.broadcast %16 : vector<1x384xf32> to vector<8x384xf32>
    %18 = arith.addf %15, %17 : vector<8x384xf32>
    %19 = vector.extract_strided_slice %13 {offsets = [0, 0], sizes = [8, 128], strides = [1, 1]} : vector<8x384xf32> to vector<8x128xf32>
    %20 = vector.extract_strided_slice %18 {offsets = [0, 0], sizes = [8, 128], strides = [1, 1]} : vector<8x384xf32> to vector<8x128xf32>
    %21 = arith.addf %19, %20 : vector<8x128xf32>
    %22 = arith.negf %21 : vector<8x128xf32>
    %23 = math.exp %22 : vector<8x128xf32>
    %cst_18 = arith.constant 1.000000e+00 : f32
    %24 = vector.broadcast %cst_18 : f32 to vector<8x128xf32>
    %25 = arith.addf %24, %23 : vector<8x128xf32>
    %26 = arith.divf %24, %25 : vector<8x128xf32>
    %27 = vector.extract_strided_slice %13 {offsets = [0, 128], sizes = [8, 128], strides = [1, 1]} : vector<8x384xf32> to vector<8x128xf32>
    %28 = vector.extract_strided_slice %18 {offsets = [0, 128], sizes = [8, 128], strides = [1, 1]} : vector<8x384xf32> to vector<8x128xf32>
    %29 = arith.addf %27, %28 : vector<8x128xf32>
    %30 = arith.negf %29 : vector<8x128xf32>
    %31 = math.exp %30 : vector<8x128xf32>
    %cst_19 = arith.constant 1.000000e+00 : f32
    %32 = vector.broadcast %cst_19 : f32 to vector<8x128xf32>
    %33 = arith.addf %32, %31 : vector<8x128xf32>
    %34 = arith.divf %32, %33 : vector<8x128xf32>
    %35 = vector.extract_strided_slice %13 {offsets = [0, 256], sizes = [8, 128], strides = [1, 1]} : vector<8x384xf32> to vector<8x128xf32>
    %36 = vector.extract_strided_slice %18 {offsets = [0, 256], sizes = [8, 128], strides = [1, 1]} : vector<8x384xf32> to vector<8x128xf32>
    %37 = arith.mulf %26, %36 : vector<8x128xf32>
    %38 = arith.addf %35, %37 : vector<8x128xf32>
    %39 = math.tanh %38 : vector<8x128xf32>
    %40 = vector.extract_strided_slice %34 {offsets = [0, 0], sizes = [8, 32], strides = [1, 1]} : vector<8x128xf32> to vector<8x32xf32>
    %cst_20 = arith.constant 1.000000e+00 : f32
    %41 = vector.broadcast %cst_20 : f32 to vector<8x32xf32>
    %42 = arith.subf %41, %40 : vector<8x32xf32>
    %43 = vector.extract_strided_slice %39 {offsets = [0, 0], sizes = [8, 32], strides = [1, 1]} : vector<8x128xf32> to vector<8x32xf32>
    %44 = arith.mulf %42, %43 : vector<8x32xf32>
    %45 = arith.mulf %40, %8 : vector<8x32xf32>
    %46 = arith.addf %44, %45 : vector<8x32xf32>
    %c0_21 = arith.constant 0 : index
    %c0_22 = arith.constant 0 : index
    %47 = vector.load %arg9[%c0_21, %c0_22] : memref<32x16xf32, #tpu.memory_space<vmem>>, vector<32x16xf32>
    %cst_23 = arith.constant dense<0.000000e+00> : vector<8x16xf32>
    %48 = tpu.matmul %46, %47, %cst_23 {dimension_numbers = #tpu.dot_dimension_numbers<[1], [0], [0], [1], [0, 0, 1, 1], [], []>} : vector<8x32xf32>, vector<32x16xf32>, vector<8x16xf32> -> vector<8x16xf32>
    %c0_24 = arith.constant 0 : index
    %c0_25 = arith.constant 0 : index
    %49 = vector.load %arg10[%c0_24, %c0_25] : memref<1x16xf32, #tpu.memory_space<vmem>>, vector<1x16xf32>
    %50 = vector.broadcast %49 : vector<1x16xf32> to vector<8x16xf32>
    %51 = arith.addf %48, %50 : vector<8x16xf32>
    %c0_26 = arith.constant 0 : index
    %c0_27 = arith.constant 0 : index
    %52 = vector.load %arg11[%c0_26, %c0_27] : memref<8x16xf32, #tpu.memory_space<vmem>>, vector<8x16xf32>
    tpu.vector_store %arg11[%c0_26, %c0_27], %51 {strides = array<i32>} : memref<8x16xf32, #tpu.memory_space<vmem>>, vector<8x16xf32>,
    %c0_28 = arith.constant 0 : index
    %c0_29 = arith.constant 0 : index
    %53 = vector.load %arg12[%c0_28, %c0_29] : memref<8x32xf32, #tpu.memory_space<vmem>>, vector<8x32xf32>
    tpu.vector_store %arg12[%c0_28, %c0_29], %46 {strides = array<i32>} : memref<8x32xf32, #tpu.memory_space<vmem>>, vector<8x32xf32>,
    return
  }
  func.func @transform_0(%arg0: i32) -> (i32, i32) {
    %c0_i32 = arith.constant 0 : i32
    %c0_i32_0 = arith.constant 0 : i32
    return %arg0, %c0_i32 : i32, i32
  }
  func.func @transform_1(%arg0: i32) -> (i32, i32) {
    %c0_i32 = arith.constant 0 : i32
    %c0_i32_0 = arith.constant 0 : i32
    return %arg0, %c0_i32 : i32, i32
  }
  func.func @transform_2(%arg0: i32) -> (i32, i32) {
    %c0_i32 = arith.constant 0 : i32
    %c0_i32_0 = arith.constant 0 : i32
    %c0_i32_1 = arith.constant 0 : i32
    return %c0_i32, %c0_i32_0 : i32, i32
  }
  func.func @transform_3(%arg0: i32) -> (i32, i32) {
    %c0_i32 = arith.constant 0 : i32
    %c0_i32_0 = arith.constant 0 : i32
    %c0_i32_1 = arith.constant 0 : i32
    return %c0_i32, %c0_i32_0 : i32, i32
  }
  func.func @transform_4(%arg0: i32) -> (i32, i32) {
    %c0_i32 = arith.constant 0 : i32
    %c0_i32_0 = arith.constant 0 : i32
    %c0_i32_1 = arith.constant 0 : i32
    return %c0_i32, %c0_i32_0 : i32, i32
  }
  func.func @transform_5(%arg0: i32) -> (i32, i32) {
    %c0_i32 = arith.constant 0 : i32
    %c0_i32_0 = arith.constant 0 : i32
    %c0_i32_1 = arith.constant 0 : i32
    return %c0_i32, %c0_i32_0 : i32, i32
  }
  func.func @transform_6(%arg0: i32) -> (i32, i32) {
    %c0_i32 = arith.constant 0 : i32
    %c0_i32_0 = arith.constant 0 : i32
    %c0_i32_1 = arith.constant 0 : i32
    return %c0_i32, %c0_i32_0 : i32, i32
  }
  func.func @transform_7(%arg0: i32) -> (i32, i32) {
    %c0_i32 = arith.constant 0 : i32
    %c0_i32_0 = arith.constant 0 : i32
    %c0_i32_1 = arith.constant 0 : i32
    return %c0_i32, %c0_i32_0 : i32, i32
  }
  func.func @transform_8(%arg0: i32) -> (i32, i32) {
    %c0_i32 = arith.constant 0 : i32
    %c0_i32_0 = arith.constant 0 : i32
    %c0_i32_1 = arith.constant 0 : i32
    return %c0_i32, %c0_i32_0 : i32, i32
  }
  func.func @transform_9(%arg0: i32) -> (i32, i32) {
    %c0_i32 = arith.constant 0 : i32
    %c0_i32_0 = arith.constant 0 : i32
    %c0_i32_1 = arith.constant 0 : i32
    return %c0_i32, %c0_i32_0 : i32, i32
  }
  func.func @transform_10(%arg0: i32) -> (i32, i32) {
    %c0_i32 = arith.constant 0 : i32
    %c0_i32_0 = arith.constant 0 : i32
    return %arg0, %c0_i32 : i32, i32
  }
  func.func @transform_11(%arg0: i32) -> (i32, i32) {
    %c0_i32 = arith.constant 0 : i32
    %c0_i32_0 = arith.constant 0 : i32
    return %arg0, %c0_i32 : i32, i32
  }
}

</mosaic_0001>

<llo_original>
// kernel: tpu_custom_call.1
$region0: #{tpu_custom_call.1}
  #allocation0 [shape = 'u32[]', space=smem, size = 0x4, offset = 0x4, fixed_abs, tag = 'smem constant byte address 0x4 - core index']
  #allocation1 [shape = 'u32[144,128]{1,0:T(1,128)}', space=vmem, size = 0x12000, scoped, tag = 'internal scratch']
  %s0 = inlined_call_operand.vmem [shape: f32[8,32], index: 0, kind: input, shape index: {}]
  %s1 = inlined_call_operand.vmem [shape: f32[8,32], index: 1, kind: input, shape index: {}]
  %s2 = inlined_call_operand.vmem [shape: f32[32,128], index: 2, kind: input, shape index: {}]
  %s3 = inlined_call_operand.vmem [shape: f32[1,128], index: 3, kind: input, shape index: {}]
  %s4 = inlined_call_operand.hbm [shape: f32[128,384], index: 4, kind: input, shape index: {}]
  %s5 = inlined_call_operand.vmem [shape: f32[1,384], index: 5, kind: input, shape index: {}]
  %s6 = inlined_call_operand.hbm [shape: f32[32,384], index: 6, kind: input, shape index: {}]
  %s7 = inlined_call_operand.vmem [shape: f32[1,384], index: 7, kind: input, shape index: {}]
  %s8 = inlined_call_operand.vmem [shape: f32[32,16], index: 8, kind: input, shape index: {}]
  %s9 = inlined_call_operand.vmem [shape: f32[1,16], index: 9, kind: input, shape index: {}]
  %s10 = inlined_call_operand.hbm [shape: f32[8,16], index: 10, kind: output, shape index: {0}]
  %s11 = inlined_call_operand.hbm [shape: f32[8,32], index: 11, kind: output, shape index: {1}]
  %12 = xla_tuple %s10, %s11
  %s13 = sld [smem:[#allocation0]]
  $region66: #{tpu_custom_call.1} parent=0
    _
  %s15 = ssub.s32 1, %s13
  %s16 = scalar_select 0, %s15, %s13
  $region1: #{tpu_custom_call.1} parent=0
    #allocation2 [shape = 'u8[196608]{0}', space=vmem, size = 0x30000, scoped, tag = 'input window, operand 4, single buffered']
    #allocation3 [shape = 's32[1]{0}', space=sflag, size = 0x4, scoped, tag = 'scoped memory for tpu_custom_call.1']
    #allocation4 [shape = 's32[1]{0}', space=sflag, size = 0x4, scoped, tag = 'scoped memory for tpu_custom_call.1']
    #allocation5 [shape = 'u8[49152]{0}', space=vmem, size = 0xc000, scoped, tag = 'input window, operand 6, single buffered']
    #allocation6 [shape = 's32[1]{0}', space=sflag, size = 0x4, scoped, tag = 'scoped memory for tpu_custom_call.1']
    #allocation7 [shape = 'u8[4096]{0}', space=vmem, size = 0x1000, scoped, tag = 'output window, operand 0, single buffered']
    #allocation8 [shape = 'u8[4096]{0}', space=vmem, size = 0x1000, scoped, tag = 'output window, operand 1, single buffered']
    #allocation9 [shape = 's32[1]{0}', space=sflag, size = 0x4, scoped, tag = 'scoped memory for tpu_custom_call.1']
    %17 = vsyncpa [#allocation3], 0
    %18 = vsyncpa [#allocation6], 0
    %19 = vsyncpa [#allocation4], 0
    %20 = vsyncpa [#allocation9], 0
    // Predicated region
    $region2: #{tpu_custom_call.1} parent=1 // pred_check
      _
    $region3: #{tpu_custom_call.1} parent=1 // pred_check_branch
      %22 = sbr.rel (0) target = $region5
    $region4: #{tpu_custom_call.1} parent=1 // pred_region
      _
    $region5: #{tpu_custom_call.1} parent=1 // pred_fallthru
      _
    // Predicated region
    $region6: #{tpu_custom_call.1} parent=1 // pred_check
      _
    $region7: #{tpu_custom_call.1} parent=1 // pred_check_branch
      %24 = sbr.rel (0) target = $region9
    $region8: #{tpu_custom_call.1} parent=1 // pred_region
      _
    $region9: #{tpu_custom_call.1} parent=1 // pred_fallthru
      _
    // Predicated region
    $region10: #{tpu_custom_call.1} parent=1 // pred_check
      _
    $region11: #{tpu_custom_call.1} parent=1 // pred_check_branch
      %26 = sbr.rel (0) target = $region13
    $region12: #{tpu_custom_call.1} parent=1 // pred_region
      _
    $region13: #{tpu_custom_call.1} parent=1 // pred_fallthru
      _
    // Predicated region
    $region14: #{tpu_custom_call.1} parent=1 // pred_check
      _
    $region15: #{tpu_custom_call.1} parent=1 // pred_check_branch
      %28 = sbr.rel (0) target = $region17
    $region16: #{tpu_custom_call.1} parent=1 // pred_region
      _
    $region17: #{tpu_custom_call.1} parent=1 // pred_fallthru
      _
    // Predicated region
    $region18: #{tpu_custom_call.1} parent=1 // pred_check
      _
    $region19: #{tpu_custom_call.1} parent=1 // pred_check_branch
      %30 = sbr.rel (0) target = $region21
    $region20: #{tpu_custom_call.1} parent=1 // pred_region
      %s32 = ssub.s32 6144, 6144
      %33 = vsyncadd [#allocation3], %s32
      %s34 = sshll.u32 [#allocation2], 4
      %s35 = int_to_ptr.vmem [resolvable:$true] %s34
      %40 = dma.hbm_to_vmem [thread:$0]  %s4, 6144, %s35, [#allocation3], 384, 384, 24
    $region21: #{tpu_custom_call.1} parent=1 // pred_fallthru
      _
    // Predicated region
    $region22: #{tpu_custom_call.1} parent=1 // pred_check
      _
    $region23: #{tpu_custom_call.1} parent=1 // pred_check_branch
      %42 = sbr.rel (0) target = $region25
    $region24: #{tpu_custom_call.1} parent=1 // pred_region
      _
    $region25: #{tpu_custom_call.1} parent=1 // pred_fallthru
      _
    // Predicated region
    $region26: #{tpu_custom_call.1} parent=1 // pred_check
      _
    $region27: #{tpu_custom_call.1} parent=1 // pred_check_branch
      %44 = sbr.rel (0) target = $region29
    $region28: #{tpu_custom_call.1} parent=1 // pred_region
      %s46 = ssub.s32 1536, 1536
      %47 = vsyncadd [#allocation6], %s46
      %s48 = sshll.u32 [#allocation5], 4
      %s49 = int_to_ptr.vmem [resolvable:$true] %s48
      %54 = dma.hbm_to_vmem [thread:$0]  %s6, 1536, %s49, [#allocation6], 384, 384, 24
    $region29: #{tpu_custom_call.1} parent=1 // pred_fallthru
      _
    // Predicated region
    $region30: #{tpu_custom_call.1} parent=1 // pred_check
      _
    $region31: #{tpu_custom_call.1} parent=1 // pred_check_branch
      %56 = sbr.rel (0) target = $region33
    $region32: #{tpu_custom_call.1} parent=1 // pred_region
      _
    $region33: #{tpu_custom_call.1} parent=1 // pred_fallthru
      _
    // Predicated region
    $region34: #{tpu_custom_call.1} parent=1 // pred_check
      _
    $region35: #{tpu_custom_call.1} parent=1 // pred_check_branch
      %58 = sbr.rel (0) target = $region37
    $region36: #{tpu_custom_call.1} parent=1 // pred_region
      _
    $region37: #{tpu_custom_call.1} parent=1 // pred_fallthru
      _
    // Predicated region
    $region38: #{tpu_custom_call.1} parent=1 // pred_check
      _
    $region39: #{tpu_custom_call.1} parent=1 // pred_check_branch
      %60 = sbr.rel (0) target = $region41
    $region40: #{tpu_custom_call.1} parent=1 // pred_region
      _
    $region41: #{tpu_custom_call.1} parent=1 // pred_fallthru
      _
    // Predicated region
    $region42: #{tpu_custom_call.1} parent=1 // pred_check
      _
    $region43: #{tpu_custom_call.1} parent=1 // pred_check_branch
      %62 = sbr.rel (0) target = $region45
    $region44: #{tpu_custom_call.1} parent=1 // pred_region
      %63 = dma.done [#allocation3], 6144
    $region45: #{tpu_custom_call.1} parent=1 // pred_fallthru
      _
    // Predicated region
    $region46: #{tpu_custom_call.1} parent=1 // pred_check
      _
    $region47: #{tpu_custom_call.1} parent=1 // pred_check_branch
      %65 = sbr.rel (0) target = $region49
    $region48: #{tpu_custom_call.1} parent=1 // pred_region
      %66 = dma.done [#allocation6], 1536
    $region49: #{tpu_custom_call.1} parent=1 // pred_fallthru
      _
    %v67 = vld [vmem:[%s0] sm:$0xff]
    %v68 = vld [vmem:[%s2] sm:$0xff]
    %v69 = vld [vmem:[%s2 + $0x8] sm:$0xff]
    %v70 = vld [vmem:[%s2 + $0x10] sm:$0xff]
    %v71 = vld [vmem:[%s2 + $0x18] sm:$0xff]
    %v72 = vld [vmem:[%s3] sm:$0x1]
    %v74 = vlaneseq
    %v75 = vshrl.u32 %v74, 7
    %v76 = vsub.s32 0, %v75
    %v77 = vrot.slane %v72, %v76
    %vm79 = vcmask 261120
    %v81 = vsel %vm79, %v67, 0
    %83 = vmatprep.subr.mxu0 0.0
    %84 = vmatpush1.msra.mxu0 %v68
    %85 = vmatprep.subr.mxu0 0.0
    %86 = vmatpush1.msra.mxu0 %v69
    %87 = vmatprep.subr.mxu0 0.0
    %88 = vmatpush1.msra.mxu0 %v70
    %89 = vmatprep.subr.mxu0 0.0
    %90 = vmatpush1.msra.mxu0 %v71
    %91 = vmatprep.subr.mxu0 0.0
    %92 = vmatpush1.msra.mxu0 0.0
    %93 = vmatprep.subr.mxu0 0.0
    %94 = vmatpush1.msra.mxu0 0.0
    %95 = vmatprep.subr.mxu0 0.0
    %96 = vmatpush1.msra.mxu0 0.0
    %97 = vmatprep.subr.mxu0 0.0
    %98 = vmatpush1.msra.mxu0 0.0
    %99 = vmatprep.subr.mxu0 0.0
    %100 = vmatpush1.msra.mxu0 0.0
    %101 = vmatprep.subr.mxu0 0.0
    %102 = vmatpush1.msra.mxu0 0.0
    %103 = vmatprep.subr.mxu0 0.0
    %104 = vmatpush1.msra.mxu0 0.0
    %105 = vmatprep.subr.mxu0 0.0
    %106 = vmatpush1.msra.mxu0 0.0
    %107 = vmatprep.subr.mxu0 0.0
    %108 = vmatpush1.msra.mxu0 0.0
    %109 = vmatprep.subr.mxu0 0.0
    %110 = vmatpush1.msra.mxu0 0.0
    %111 = vmatprep.subr.mxu0 0.0
    %112 = vmatpush1.msra.mxu0 0.0
    %113 = vmatprep.subr.mxu0 0.0
    %114 = vmatpush1.msra.mxu0 0.0
    %115 = vmatprep.subr.mxu0 0.0
    %116 = vmatpush1.msra.mxu0 0.0
    %117 = vmatprep.subr.mxu0 0.0
    %118 = vmatpush1.msra.mxu0 0.0
    %119 = vmatprep.subr.mxu0 0.0
    %120 = vmatpush1.msra.mxu0 0.0
    %121 = vmatprep.subr.mxu0 0.0
    %122 = vmatpush1.msra.mxu0 0.0
    %123 = vmatprep.subr.mxu0 0.0
    %124 = vmatpush1.msra.mxu0 0.0
    %125 = vmatprep.subr.mxu0 0.0
    %126 = vmatpush1.msra.mxu0 0.0
    %127 = vmatprep.subr.mxu0 0.0
    %128 = vmatpush1.msra.mxu0 0.0
    %129 = vmatprep.subr.mxu0 0.0
    %130 = vmatpush1.msra.mxu0 0.0
    %131 = vmatprep.subr.mxu0 0.0
    %132 = vmatpush1.msra.mxu0 0.0
    %133 = vmatprep.subr.mxu0 0.0
    %134 = vmatpush1.msra.mxu0 0.0
    %135 = vmatprep.subr.mxu0 0.0
    %136 = vmatpush1.msra.mxu0 0.0
    %137 = vmatprep.subr.mxu0 0.0
    %138 = vmatpush1.msra.mxu0 0.0
    %139 = vmatprep.subr.mxu0 0.0
    %140 = vmatpush1.msra.mxu0 0.0
    %141 = vmatprep.subr.mxu0 0.0
    %142 = vmatpush1.msra.mxu0 0.0
    %143 = vmatprep.subr.mxu0 0.0
    %144 = vmatpush1.msra.mxu0 0.0
    %145 = vmatprep.subr.mxu0 0.0
    %146 = vmatpush1.msra.mxu0 0.0
    %147 = vmatprep.mubr.f32.mxu0 0.0
    %148 = vmatmul.mubr.f32.gmra.mrb[0].mxu0 %v81
    %v149 = vpop.f32.mrb[0].mxu0
    %v150 = vadd.f32 %v77, %v149
    %v151 = vpop.f32.mrb[0].mxu0
    %152 = vdwg.mxu0
    %v153 = vmax.f32 %v150, 0.0
    %v154 = vld [vmem:[%s1] sm:$0xff]
    %v155 = vld [vmem:[#allocation2] sm:$0xff]
    %v156 = vld [vmem:[#allocation2 + $0x8] sm:$0xff]
    %v157 = vld [vmem:[#allocation2 + $0x10] sm:$0xff]
    %v158 = vld [vmem:[#allocation2 + $0x18] sm:$0xff]
    %v159 = vld [vmem:[#allocation2 + $0x20] sm:$0xff]
    %v160 = vld [vmem:[#allocation2 + $0x28] sm:$0xff]
    %v161 = vld [vmem:[#allocation2 + $0x30] sm:$0xff]
    %v162 = vld [vmem:[#allocation2 + $0x38] sm:$0xff]
    %v163 = vld [vmem:[#allocation2 + $0x40] sm:$0xff]
    %v164 = vld [vmem:[#allocation2 + $0x48] sm:$0xff]
    %v165 = vld [vmem:[#allocation2 + $0x50] sm:$0xff]
    %v166 = vld [vmem:[#allocation2 + $0x58] sm:$0xff]
    %v167 = vld [vmem:[#allocation2 + $0x60] sm:$0xff]
    %v168 = vld [vmem:[#allocation2 + $0x68] sm:$0xff]
    %v169 = vld [vmem:[#allocation2 + $0x70] sm:$0xff]
    %v170 = vld [vmem:[#allocation2 + $0x78] sm:$0xff]
    %v171 = vld [vmem:[#allocation2 + $0x80] sm:$0xff]
    %v172 = vld [vmem:[#allocation2 + $0x88] sm:$0xff]
    %v173 = vld [vmem:[#allocation2 + $0x90] sm:$0xff]
    %v174 = vld [vmem:[#allocation2 + $0x98] sm:$0xff]
    %v175 = vld [vmem:[#allocation2 + $0xa0] sm:$0xff]
    %v176 = vld [vmem:[#allocation2 + $0xa8] sm:$0xff]
    %v177 = vld [vmem:[#allocation2 + $0xb0] sm:$0xff]
    %v178 = vld [vmem:[#allocation2 + $0xb8] sm:$0xff]
    %v179 = vld [vmem:[#allocation2 + $0xc0] sm:$0xff]
    %v180 = vld [vmem:[#allocation2 + $0xc8] sm:$0xff]
    %v181 = vld [vmem:[#allocation2 + $0xd0] sm:$0xff]
    %v182 = vld [vmem:[#allocation2 + $0xd8] sm:$0xff]
    %v183 = vld [vmem:[#allocation2 + $0xe0] sm:$0xff]
    %v184 = vld [vmem:[#allocation2 + $0xe8] sm:$0xff]
    %v185 = vld [vmem:[#allocation2 + $0xf0] sm:$0xff]
    %v186 = vld [vmem:[#allocation2 + $0xf8] sm:$0xff]
    %v187 = vld [vmem:[#allocation2 + $0x100] sm:$0xff]
    %v188 = vld [vmem:[#allocation2 + $0x108] sm:$0xff]
    %v189 = vld [vmem:[#allocation2 + $0x110] sm:$0xff]
    %v190 = vld [vmem:[#allocation2 + $0x118] sm:$0xff]
    %v191 = vld [vmem:[#allocation2 + $0x120] sm:$0xff]
    %v192 = vld [vmem:[#allocation2 + $0x128] sm:$0xff]
    %v193 = vld [vmem:[#allocation2 + $0x130] sm:$0xff]
    %v194 = vld [vmem:[#allocation2 + $0x138] sm:$0xff]
    %v195 = vld [vmem:[#allocation2 + $0x140] sm:$0xff]
    %v196 = vld [vmem:[#allocation2 + $0x148] sm:$0xff]
    %v197 = vld [vmem:[#allocation2 + $0x150] sm:$0xff]
    %v198 = vld [vmem:[#allocation2 + $0x158] sm:$0xff]
    %v199 = vld [vmem:[#allocation2 + $0x160] sm:$0xff]
    %v200 = vld [vmem:[#allocation2 + $0x168] sm:$0xff]
    %v201 = vld [vmem:[#allocation2 + $0x170] sm:$0xff]
    %v202 = vld [vmem:[#allocation2 + $0x178] sm:$0xff]
    %v203 = vld [vmem:[%s5] sm:$0x7]
    %v205 = vlaneseq
    %v206 = vshrl.u32 %v205, 7
    %v207 = vsub.s32 0, %v206
    %v208 = vrot.slane %v203, %v207
    %v209 = vlaneseq
    %v210 = vshrl.u32 %v209, 7
    %v211 = vsub.s32 1, %v210
    %v212 = vrot.slane %v203, %v211
    %v213 = vlaneseq
    %v214 = vshrl.u32 %v213, 7
    %v215 = vsub.s32 2, %v214
    %v216 = vrot.slane %v203, %v215
    %220 = vmatprep.subr.mxu0 %v156
    %221 = vmatpush1.msra.mxu0 %v155
    %222 = vmatprep.subr.mxu0 %v159
    %223 = vmatpush1.msra.mxu0 %v158
    %224 = vmatprep.subr.mxu0 %v162
    %225 = vmatpush1.msra.mxu0 %v161
    %226 = vmatprep.subr.mxu0 %v165
    %227 = vmatpush1.msra.mxu0 %v164
    %228 = vmatprep.subr.mxu0 %v168
    %229 = vmatpush1.msra.mxu0 %v167
    %230 = vmatprep.subr.mxu0 %v171
    %231 = vmatpush1.msra.mxu0 %v170
    %232 = vmatprep.subr.mxu0 %v174
    %233 = vmatpush1.msra.mxu0 %v173
    %234 = vmatprep.subr.mxu0 %v177
    %235 = vmatpush1.msra.mxu0 %v176
    %236 = vmatprep.subr.mxu0 %v180
    %237 = vmatpush1.msra.mxu0 %v179
    %238 = vmatprep.subr.mxu0 %v183
    %239 = vmatpush1.msra.mxu0 %v182
    %240 = vmatprep.subr.mxu0 %v186
    %241 = vmatpush1.msra.mxu0 %v185
    %242 = vmatprep.subr.mxu0 %v189
    %243 = vmatpush1.msra.mxu0 %v188
    %244 = vmatprep.subr.mxu0 %v192
    %245 = vmatpush1.msra.mxu0 %v191
    %246 = vmatprep.subr.mxu0 %v195
    %247 = vmatpush1.msra.mxu0 %v194
    %248 = vmatprep.subr.mxu0 %v198
    %249 = vmatpush1.msra.mxu0 %v197
    %250 = vmatprep.subr.mxu0 %v201
    %251 = vmatpush1.msra.mxu0 %v200
    %252 = vmatprep.subr.mxu0 0.0
    %253 = vmatpush1.msra.mxu0 0.0
    %254 = vmatprep.subr.mxu0 0.0
    %255 = vmatpush1.msra.mxu0 0.0
    %256 = vmatprep.subr.mxu0 0.0
    %257 = vmatpush1.msra.mxu0 0.0
    %258 = vmatprep.subr.mxu0 0.0
    %259 = vmatpush1.msra.mxu0 0.0
    %260 = vmatprep.subr.mxu0 0.0
    %261 = vmatpush1.msra.mxu0 0.0
    %262 = vmatprep.subr.mxu0 0.0
    %263 = vmatpush1.msra.mxu0 0.0
    %264 = vmatprep.subr.mxu0 0.0
    %265 = vmatpush1.msra.mxu0 0.0
    %266 = vmatprep.subr.mxu0 0.0
    %267 = vmatpush1.msra.mxu0 0.0
    %268 = vmatprep.subr.mxu0 0.0
    %269 = vmatpush1.msra.mxu0 0.0
    %270 = vmatprep.subr.mxu0 0.0
    %271 = vmatpush1.msra.mxu0 0.0
    %272 = vmatprep.subr.mxu0 0.0
    %273 = vmatpush1.msra.mxu0 0.0
    %274 = vmatprep.subr.mxu0 0.0
    %275 = vmatpush1.msra.mxu0 0.0
    %276 = vmatprep.subr.mxu0 0.0
    %277 = vmatpush1.msra.mxu0 0.0
    %278 = vmatprep.subr.mxu0 0.0
    %279 = vmatpush1.msra.mxu0 0.0
    %280 = vmatprep.subr.mxu0 0.0
    %281 = vmatpush1.msra.mxu0 0.0
    %282 = vmatprep.subr.mxu0 0.0
    %283 = vmatpush1.msra.mxu0 0.0
    %284 = vmatprep.mubr.f32.mxu0 0.0
    %285 = vmatmul.mubr.f32.gmra.mrb[0].mxu0 %v153
    %v286 = vpop.f32.mrb[0].mxu0
    %v287 = vadd.f32 %v208, %v286
    %v288 = vpop.f32.mrb[0].mxu0
    %v289 = vadd.f32 %v212, %v288
    %290 = vdwg.mxu0
    %291 = vmatprep.subr.mxu0 0.0
    %292 = vmatpush1.msra.mxu0 %v157
    %293 = vmatprep.subr.mxu0 0.0
    %294 = vmatpush1.msra.mxu0 %v160
    %295 = vmatprep.subr.mxu0 0.0
    %296 = vmatpush1.msra.mxu0 %v163
    %297 = vmatprep.subr.mxu0 0.0
    %298 = vmatpush1.msra.mxu0 %v166
    %299 = vmatprep.subr.mxu0 0.0
    %300 = vmatpush1.msra.mxu0 %v169
    %301 = vmatprep.subr.mxu0 0.0
    %302 = vmatpush1.msra.mxu0 %v172
    %303 = vmatprep.subr.mxu0 0.0
    %304 = vmatpush1.msra.mxu0 %v175
    %305 = vmatprep.subr.mxu0 0.0
    %306 = vmatpush1.msra.mxu0 %v178
    %307 = vmatprep.subr.mxu0 0.0
    %308 = vmatpush1.msra.mxu0 %v181
    %309 = vmatprep.subr.mxu0 0.0
    %310 = vmatpush1.msra.mxu0 %v184
    %311 = vmatprep.subr.mxu0 0.0
    %312 = vmatpush1.msra.mxu0 %v187
    %313 = vmatprep.subr.mxu0 0.0
    %314 = vmatpush1.msra.mxu0 %v190
    %315 = vmatprep.subr.mxu0 0.0
    %316 = vmatpush1.msra.mxu0 %v193
    %317 = vmatprep.subr.mxu0 0.0
    %318 = vmatpush1.msra.mxu0 %v196
    %319 = vmatprep.subr.mxu0 0.0
    %320 = vmatpush1.msra.mxu0 %v199
    %321 = vmatprep.subr.mxu0 0.0
    %322 = vmatpush1.msra.mxu0 %v202
    %323 = vmatprep.subr.mxu0 0.0
    %324 = vmatpush1.msra.mxu0 0.0
    %325 = vmatprep.subr.mxu0 0.0
    %326 = vmatpush1.msra.mxu0 0.0
    %327 = vmatprep.subr.mxu0 0.0
    %328 = vmatpush1.msra.mxu0 0.0
    %329 = vmatprep.subr.mxu0 0.0
    %330 = vmatpush1.msra.mxu0 0.0
    %331 = vmatprep.subr.mxu0 0.0
    %332 = vmatpush1.msra.mxu0 0.0
    %333 = vmatprep.subr.mxu0 0.0
    %334 = vmatpush1.msra.mxu0 0.0
    %335 = vmatprep.subr.mxu0 0.0
    %336 = vmatpush1.msra.mxu0 0.0
    %337 = vmatprep.subr.mxu0 0.0
    %338 = vmatpush1.msra.mxu0 0.0
    %339 = vmatprep.subr.mxu0 0.0
    %340 = vmatpush1.msra.mxu0 0.0
    %341 = vmatprep.subr.mxu0 0.0
    %342 = vmatpush1.msra.mxu0 0.0
    %343 = vmatprep.subr.mxu0 0.0
    %344 = vmatpush1.msra.mxu0 0.0
    %345 = vmatprep.subr.mxu0 0.0
    %346 = vmatpush1.msra.mxu0 0.0
    %347 = vmatprep.subr.mxu0 0.0
    %348 = vmatpush1.msra.mxu0 0.0
    %349 = vmatprep.subr.mxu0 0.0
    %350 = vmatpush1.msra.mxu0 0.0
    %351 = vmatprep.subr.mxu0 0.0
    %352 = vmatpush1.msra.mxu0 0.0
    %353 = vmatprep.subr.mxu0 0.0
    %354 = vmatpush1.msra.mxu0 0.0
    %355 = vmatprep.mubr.f32.mxu0 0.0
    %356 = vmatmul.mubr.f32.gmra.mrb[0].mxu0 %v153
    %v357 = vpop.f32.mrb[0].mxu0
    %v358 = vadd.f32 %v216, %v357
    %v359 = vpop.f32.mrb[0].mxu0
    %360 = vdwg.mxu0
    %v361 = vld [vmem:[#allocation5] sm:$0xff]
    %v362 = vld [vmem:[#allocation5 + $0x8] sm:$0xff]
    %v363 = vld [vmem:[#allocation5 + $0x10] sm:$0xff]
    %v364 = vld [vmem:[#allocation5 + $0x18] sm:$0xff]
    %v365 = vld [vmem:[#allocation5 + $0x20] sm:$0xff]
    %v366 = vld [vmem:[#allocation5 + $0x28] sm:$0xff]
    %v367 = vld [vmem:[#allocation5 + $0x30] sm:$0xff]
    %v368 = vld [vmem:[#allocation5 + $0x38] sm:$0xff]
    %v369 = vld [vmem:[#allocation5 + $0x40] sm:$0xff]
    %v370 = vld [vmem:[#allocation5 + $0x48] sm:$0xff]
    %v371 = vld [vmem:[#allocation5 + $0x50] sm:$0xff]
    %v372 = vld [vmem:[#allocation5 + $0x58] sm:$0xff]
    %v373 = vld [vmem:[%s7] sm:$0x7]
    %v375 = vlaneseq
    %v376 = vshrl.u32 %v375, 7
    %v377 = vsub.s32 0, %v376
    %v378 = vrot.slane %v373, %v377
    %v379 = vlaneseq
    %v380 = vshrl.u32 %v379, 7
    %v381 = vsub.s32 1, %v380
    %v382 = vrot.slane %v373, %v381
    %v383 = vlaneseq
    %v384 = vshrl.u32 %v383, 7
    %v385 = vsub.s32 2, %v384
    %v386 = vrot.slane %v373, %v385
    %v391 = vsel %vm79, %v154, 0
    %393 = vmatprep.subr.mxu0 %v362
    %394 = vmatpush1.msra.mxu0 %v361
    %395 = vmatprep.subr.mxu0 %v365
    %396 = vmatpush1.msra.mxu0 %v364
    %397 = vmatprep.subr.mxu0 %v368
    %398 = vmatpush1.msra.mxu0 %v367
    %399 = vmatprep.subr.mxu0 %v371
    %400 = vmatpush1.msra.mxu0 %v370
    %401 = vmatprep.subr.mxu0 0.0
    %402 = vmatpush1.msra.mxu0 0.0
    %403 = vmatprep.subr.mxu0 0.0
    %404 = vmatpush1.msra.mxu0 0.0
    %405 = vmatprep.subr.mxu0 0.0
    %406 = vmatpush1.msra.mxu0 0.0
    %407 = vmatprep.subr.mxu0 0.0
    %408 = vmatpush1.msra.mxu0 0.0
    %409 = vmatprep.subr.mxu0 0.0
    %410 = vmatpush1.msra.mxu0 0.0
    %411 = vmatprep.subr.mxu0 0.0
    %412 = vmatpush1.msra.mxu0 0.0
    %413 = vmatprep.subr.mxu0 0.0
    %414 = vmatpush1.msra.mxu0 0.0
    %415 = vmatprep.subr.mxu0 0.0
    %416 = vmatpush1.msra.mxu0 0.0
    %417 = vmatprep.subr.mxu0 0.0
    %418 = vmatpush1.msra.mxu0 0.0
    %419 = vmatprep.subr.mxu0 0.0
    %420 = vmatpush1.msra.mxu0 0.0
    %421 = vmatprep.subr.mxu0 0.0
    %422 = vmatpush1.msra.mxu0 0.0
    %423 = vmatprep.subr.mxu0 0.0
    %424 = vmatpush1.msra.mxu0 0.0
    %425 = vmatprep.subr.mxu0 0.0
    %426 = vmatpush1.msra.mxu0 0.0
    %427 = vmatprep.subr.mxu0 0.0
    %428 = vmatpush1.msra.mxu0 0.0
    %429 = vmatprep.subr.mxu0 0.0
    %430 = vmatpush1.msra.mxu0 0.0
    %431 = vmatprep.subr.mxu0 0.0
    %432 = vmatpush1.msra.mxu0 0.0
    %433 = vmatprep.subr.mxu0 0.0
    %434 = vmatpush1.msra.mxu0 0.0
    %435 = vmatprep.subr.mxu0 0.0
    %436 = vmatpush1.msra.mxu0 0.0
    %437 = vmatprep.subr.mxu0 0.0
    %438 = vmatpush1.msra.mxu0 0.0
    %439 = vmatprep.subr.mxu0 0.0
    %440 = vmatpush1.msra.mxu0 0.0
    %441 = vmatprep.subr.mxu0 0.0
    %442 = vmatpush1.msra.mxu0 0.0
    %443 = vmatprep.subr.mxu0 0.0
    %444 = vmatpush1.msra.mxu0 0.0
    %445 = vmatprep.subr.mxu0 0.0
    %446 = vmatpush1.msra.mxu0 0.0
    %447 = vmatprep.subr.mxu0 0.0
    %448 = vmatpush1.msra.mxu0 0.0
    %449 = vmatprep.subr.mxu0 0.0
    %450 = vmatpush1.msra.mxu0 0.0
    %451 = vmatprep.subr.mxu0 0.0
    %452 = vmatpush1.msra.mxu0 0.0
    %453 = vmatprep.subr.mxu0 0.0
    %454 = vmatpush1.msra.mxu0 0.0
    %455 = vmatprep.subr.mxu0 0.0
    %456 = vmatpush1.msra.mxu0 0.0
    %457 = vmatprep.mubr.f32.mxu0 0.0
    %458 = vmatmul.mubr.f32.gmra.mrb[0].mxu0 %v391
    %v459 = vpop.f32.mrb[0].mxu0
    %v460 = vadd.f32 %v378, %v459
    %v461 = vpop.f32.mrb[0].mxu0
    %v462 = vadd.f32 %v382, %v461
    %463 = vdwg.mxu0
    %464 = vmatprep.subr.mxu0 0.0
    %465 = vmatpush1.msra.mxu0 %v363
    %466 = vmatprep.subr.mxu0 0.0
    %467 = vmatpush1.msra.mxu0 %v366
    %468 = vmatprep.subr.mxu0 0.0
    %469 = vmatpush1.msra.mxu0 %v369
    %470 = vmatprep.subr.mxu0 0.0
    %471 = vmatpush1.msra.mxu0 %v372
    %472 = vmatprep.subr.mxu0 0.0
    %473 = vmatpush1.msra.mxu0 0.0
    %474 = vmatprep.subr.mxu0 0.0
    %475 = vmatpush1.msra.mxu0 0.0
    %476 = vmatprep.subr.mxu0 0.0
    %477 = vmatpush1.msra.mxu0 0.0
    %478 = vmatprep.subr.mxu0 0.0
    %479 = vmatpush1.msra.mxu0 0.0
    %480 = vmatprep.subr.mxu0 0.0
    %481 = vmatpush1.msra.mxu0 0.0
    %482 = vmatprep.subr.mxu0 0.0
    %483 = vmatpush1.msra.mxu0 0.0
    %484 = vmatprep.subr.mxu0 0.0
    %485 = vmatpush1.msra.mxu0 0.0
    %486 = vmatprep.subr.mxu0 0.0
    %487 = vmatpush1.msra.mxu0 0.0
    %488 = vmatprep.subr.mxu0 0.0
    %489 = vmatpush1.msra.mxu0 0.0
    %490 = vmatprep.subr.mxu0 0.0
    %491 = vmatpush1.msra.mxu0 0.0
    %492 = vmatprep.subr.mxu0 0.0
    %493 = vmatpush1.msra.mxu0 0.0
    %494 = vmatprep.subr.mxu0 0.0
    %495 = vmatpush1.msra.mxu0 0.0
    %496 = vmatprep.subr.mxu0 0.0
    %497 = vmatpush1.msra.mxu0 0.0
    %498 = vmatprep.subr.mxu0 0.0
    %499 = vmatpush1.msra.mxu0 0.0
    %500 = vmatprep.subr.mxu0 0.0
    %501 = vmatpush1.msra.mxu0 0.0
    %502 = vmatprep.subr.mxu0 0.0
    %503 = vmatpush1.msra.mxu0 0.0
    %504 = vmatprep.subr.mxu0 0.0
    %505 = vmatpush1.msra.mxu0 0.0
    %506 = vmatprep.subr.mxu0 0.0
    %507 = vmatpush1.msra.mxu0 0.0
    %508 = vmatprep.subr.mxu0 0.0
    %509 = vmatpush1.msra.mxu0 0.0
    %510 = vmatprep.subr.mxu0 0.0
    %511 = vmatpush1.msra.mxu0 0.0
    %512 = vmatprep.subr.mxu0 0.0
    %513 = vmatpush1.msra.mxu0 0.0
    %514 = vmatprep.subr.mxu0 0.0
    %515 = vmatpush1.msra.mxu0 0.0
    %516 = vmatprep.subr.mxu0 0.0
    %517 = vmatpush1.msra.mxu0 0.0
    %518 = vmatprep.subr.mxu0 0.0
    %519 = vmatpush1.msra.mxu0 0.0
    %520 = vmatprep.subr.mxu0 0.0
    %521 = vmatpush1.msra.mxu0 0.0
    %522 = vmatprep.subr.mxu0 0.0
    %523 = vmatpush1.msra.mxu0 0.0
    %524 = vmatprep.subr.mxu0 0.0
    %525 = vmatpush1.msra.mxu0 0.0
    %526 = vmatprep.subr.mxu0 0.0
    %527 = vmatpush1.msra.mxu0 0.0
    %528 = vmatprep.mubr.f32.mxu0 0.0
    %529 = vmatmul.mubr.f32.gmra.mrb[0].mxu0 %v391
    %v530 = vpop.f32.mrb[0].mxu0
    %v531 = vadd.f32 %v386, %v530
    %v532 = vpop.f32.mrb[0].mxu0
    %533 = vdwg.mxu0
    %v534 = vadd.f32 %v287, %v460
    %v535 = vxor.u32 %v534, 2147483648
    %v536 = vmul.f32 %v535, 1.442695
    %v537 = vpow.pop %v536
    %v538 = vadd.f32 %v537, 1.0
    %v539 = vrcp.pop %v538
    %v540 = vmul.f32 1.0, %v539
    %v541 = vadd.f32 %v289, %v462
    %v542 = vxor.u32 %v541, 2147483648
    %v543 = vmul.f32 %v542, 1.442695
    %v544 = vpow.pop %v543
    %v545 = vadd.f32 %v544, 1.0
    %v546 = vrcp.pop %v545
    %v547 = vmul.f32 1.0, %v546
    %v548 = vmul.f32 %v540, %v531
    %v549 = vadd.f32 %v358, %v548
    %v550 = vtanh.pop %v549
    %v551 = vsub.f32 1.0, %v547
    %v552 = vmul.f32 %v551, %v550
    %v553 = vmul.f32 %v547, %v154
    %v554 = vadd.f32 %v552, %v553
    %v555 = vld [vmem:[%s8] sm:$0xff]
    %v556 = vld [vmem:[%s8 + $0x8] sm:$0xff]
    %v557 = vld [vmem:[%s8 + $0x10] sm:$0xff]
    %v558 = vld [vmem:[%s8 + $0x18] sm:$0xff]
    %v559 = vld [vmem:[%s9] sm:$0x1]
    %v561 = vlaneseq
    %v562 = vshrl.u32 %v561, 7
    %v563 = vsub.s32 0, %v562
    %v564 = vrot.slane %v559, %v563
    %v567 = vsel %vm79, %v554, 0
    %569 = vmatprep.subr.mxu0 0.0
    %570 = vmatpush1.msra.mxu0 %v555
    %571 = vmatprep.subr.mxu0 0.0
    %572 = vmatpush1.msra.mxu0 %v556
    %573 = vmatprep.subr.mxu0 0.0
    %574 = vmatpush1.msra.mxu0 %v557
    %575 = vmatprep.subr.mxu0 0.0
    %576 = vmatpush1.msra.mxu0 %v558
    %577 = vmatprep.subr.mxu0 0.0
    %578 = vmatpush1.msra.mxu0 0.0
    %579 = vmatprep.subr.mxu0 0.0
    %580 = vmatpush1.msra.mxu0 0.0
    %581 = vmatprep.subr.mxu0 0.0
    %582 = vmatpush1.msra.mxu0 0.0
    %583 = vmatprep.subr.mxu0 0.0
    %584 = vmatpush1.msra.mxu0 0.0
    %585 = vmatprep.subr.mxu0 0.0
    %586 = vmatpush1.msra.mxu0 0.0
    %587 = vmatprep.subr.mxu0 0.0
    %588 = vmatpush1.msra.mxu0 0.0
    %589 = vmatprep.subr.mxu0 0.0
    %590 = vmatpush1.msra.mxu0 0.0
    %591 = vmatprep.subr.mxu0 0.0
    %592 = vmatpush1.msra.mxu0 0.0
    %593 = vmatprep.subr.mxu0 0.0
    %594 = vmatpush1.msra.mxu0 0.0
    %595 = vmatprep.subr.mxu0 0.0
    %596 = vmatpush1.msra.mxu0 0.0
    %597 = vmatprep.subr.mxu0 0.0
    %598 = vmatpush1.msra.mxu0 0.0
    %599 = vmatprep.subr.mxu0 0.0
    %600 = vmatpush1.msra.mxu0 0.0
    %601 = vmatprep.subr.mxu0 0.0
    %602 = vmatpush1.msra.mxu0 0.0
    %603 = vmatprep.subr.mxu0 0.0
    %604 = vmatpush1.msra.mxu0 0.0
    %605 = vmatprep.subr.mxu0 0.0
    %606 = vmatpush1.msra.mxu0 0.0
    %607 = vmatprep.subr.mxu0 0.0
    %608 = vmatpush1.msra.mxu0 0.0
    %609 = vmatprep.subr.mxu0 0.0
    %610 = vmatpush1.msra.mxu0 0.0
    %611 = vmatprep.subr.mxu0 0.0
    %612 = vmatpush1.msra.mxu0 0.0
    %613 = vmatprep.subr.mxu0 0.0
    %614 = vmatpush1.msra.mxu0 0.0
    %615 = vmatprep.subr.mxu0 0.0
    %616 = vmatpush1.msra.mxu0 0.0
    %617 = vmatprep.subr.mxu0 0.0
    %618 = vmatpush1.msra.mxu0 0.0
    %619 = vmatprep.subr.mxu0 0.0
    %620 = vmatpush1.msra.mxu0 0.0
    %621 = vmatprep.subr.mxu0 0.0
    %622 = vmatpush1.msra.mxu0 0.0
    %623 = vmatprep.subr.mxu0 0.0
    %624 = vmatpush1.msra.mxu0 0.0
    %625 = vmatprep.subr.mxu0 0.0
    %626 = vmatpush1.msra.mxu0 0.0
    %627 = vmatprep.subr.mxu0 0.0
    %628 = vmatpush1.msra.mxu0 0.0
    %629 = vmatprep.subr.mxu0 0.0
    %630 = vmatpush1.msra.mxu0 0.0
    %631 = vmatprep.subr.mxu0 0.0
    %632 = vmatpush1.msra.mxu0 0.0
    %633 = vmatprep.mubr.f32.mxu0 0.0
    %634 = vmatmul.mubr.f32.gmra.mrb[0].mxu0 %v567
    %v635 = vpop.f32.mrb[0].mxu0
    %v636 = vadd.f32 %v564, %v635
    %v637 = vpop.f32.mrb[0].mxu0
    %638 = vdwg.mxu0
    %vm639 = vcmask 130048
    %640 = vst.msk [vmem:[#allocation7] sm:$0xff] %vm639, %v636
    %641 = vst.msk [vmem:[#allocation8] sm:$0xff] %vm79, %v554
    // Predicated region
    $region50: #{tpu_custom_call.1} parent=1 // pred_check
      _
    $region51: #{tpu_custom_call.1} parent=1 // pred_check_branch
      %643 = sbr.rel (0) target = $region53
    $region52: #{tpu_custom_call.1} parent=1 // pred_region
      %s645 = ssub.s32 128, 128
      %646 = vsyncadd [#allocation4], %s645
      %s648 = sshll.u32 [#allocation7], 4
      %s649 = int_to_ptr.vmem [resolvable:$true] %s648
      %651 = dma.vmem_to_hbm [thread:$0]  %s649, 128, %s10, [#allocation4]
    $region53: #{tpu_custom_call.1} parent=1 // pred_fallthru
      _
    // Predicated region
    $region54: #{tpu_custom_call.1} parent=1 // pred_check
      _
    $region55: #{tpu_custom_call.1} parent=1 // pred_check_branch
      %653 = sbr.rel (0) target = $region57
    $region56: #{tpu_custom_call.1} parent=1 // pred_region
      %s655 = ssub.s32 128, 128
      %656 = vsyncadd [#allocation9], %s655
      %s658 = sshll.u32 [#allocation8], 4
      %s659 = int_to_ptr.vmem [resolvable:$true] %s658
      %661 = dma.vmem_to_hbm [thread:$0]  %s659, 128, %s11, [#allocation9]
    $region57: #{tpu_custom_call.1} parent=1 // pred_fallthru
      _
    // Predicated region
    $region58: #{tpu_custom_call.1} parent=1 // pred_check
      _
    $region59: #{tpu_custom_call.1} parent=1 // pred_check_branch
      %663 = sbr.rel (0) target = $region61
    $region60: #{tpu_custom_call.1} parent=1 // pred_region
      %664 = dma.done [#allocation4], 128
    $region61: #{tpu_custom_call.1} parent=1 // pred_fallthru
      _
    // Predicated region
    $region62: #{tpu_custom_call.1} parent=1 // pred_check
      _
    $region63: #{tpu_custom_call.1} parent=1 // pred_check_branch
      %666 = sbr.rel (0) target = $region65
    $region64: #{tpu_custom_call.1} parent=1 // pred_region
      %667 = dma.done [#allocation9], 128
    $region65: #{tpu_custom_call.1} parent=1 // pred_fallthru
      _
    %668 = vsyncpa [#allocation3], 1
    %669 = vsyncpa [#allocation6], 1
    %670 = vsyncpa [#allocation4], 1
    %671 = vsyncpa [#allocation9], 1

</llo_original>
